<compile_context>
chip_gen: v6e
topology: v6e:2x2x1
jax: 0.10.0
libtpu: 0.0.40
codegen_flags: <defaults>
</compile_context>

<pallas_src>
import jax
import jax.numpy as jnp
from jax import lax
from jax.experimental import pallas as pl
from jax.experimental.pallas import tpu as pltpu


# "A @ B.T": contract the minor dim of both operands (flash-attention q@k^T).
_NT_DIMS = (((1,), (1,)), ((), ()))
# "A.T @ B": contract the major dim of both operands (only used when O > 1).
_TN_DIMS = (((0,), (0,)), ((), ()))


def _ceil_to(x: int, m: int) -> int:
    return -(-x // m) * m


# ---------------------------------------------------------------------------
# Pallas kernel: full 5-layer Critic MLP on one batch tile (feature-major)
# ---------------------------------------------------------------------------
def critic_kernel(x_ref, w1_ref, w2_ref, w3_ref, w4_ref, w5_ref, b_ref, out_ref):
    """x_ref : (tile_b, Fp)  packed [state | action | 0-pad], row-major
       w1_ref: (H, Fp)   w2_ref: (H, H)   w3_ref: (2H, H)   w4_ref: (H, 2H)
       w5_ref: (H, O)    b_ref : (5H + O, 1) packed biases (column)
       out_ref: (O, tile_b)  lane-dense, batch on lanes
    """
    d1 = w1_ref.shape[0]
    d2 = w2_ref.shape[0]
    d3 = w3_ref.shape[0]
    d4 = w4_ref.shape[0]
    out_dim = w5_ref.shape[1]

    o1 = d1
    o2 = o1 + d2
    o3 = o2 + d3
    o4 = o3 + d4
    b1 = b_ref[0:o1, :]                 # (H, 1)
    b2 = b_ref[o1:o2, :]                # (H, 1)
    b3 = b_ref[o2:o3, :]                # (2H, 1)
    b4 = b_ref[o3:o4, :]                # (H, 1)
    b5 = b_ref[o4:o4 + out_dim, :]      # (O, 1)

    x = x_ref[...]                      # (tile_b, Fp)

    # Layer 1: relu(W1 @ x.T + b1).  NT contraction fuses the transpose into
    # the MXU op (same dimension numbers as q @ k.T in flash attention).
    h = lax.dot_general(w1_ref[...], x, _NT_DIMS,
                        preferred_element_type=jnp.float32) + b1
    h = jnp.maximum(h, 0.0)                                              # (H, tB)

    h = jnp.dot(w2_ref[...], h, preferred_element_type=jnp.float32) + b2
    h = jnp.maximum(h, 0.0)                                              # (H, tB)

    h = jnp.dot(w3_ref[...], h, preferred_element_type=jnp.float32) + b3
    h = jnp.maximum(h, 0.0)                                              # (2H, tB)

    h = jnp.dot(w4_ref[...], h, preferred_element_type=jnp.float32) + b4
    h = jnp.maximum(h, 0.0)                                              # (H, tB)

    if out_dim == 1:
        # Degenerate final Linear: VPU multiply + XLU sublane reduce instead
        # of an MXU matmul with a single live output row.
        out_ref[...] = jnp.sum(h * w5_ref[...], axis=0, keepdims=True) + b5
    else:
        out_ref[...] = lax.dot_general(w5_ref[...], h, _TN_DIMS,
                                       preferred_element_type=jnp.float32) + b5


# ---------------------------------------------------------------------------
# One-time parameter repacking (PyTorch layout -> kernel operands)
# ---------------------------------------------------------------------------
def prepare_critic_params(params):
    """params: [(w,b), ...] with w (out,in), b (out,), PyTorch nn.Linear layout."""
    (w1, b1), (w2, b2), (w3, b3), (w4, b4), (w5, b5) = params
    f = w1.shape[1]
    fp = _ceil_to(f, 8)                                   # 28 -> 32 (zero columns)
    w1p = jnp.pad(w1.astype(jnp.float32), ((0, 0), (0, fp - f)))
    bias = jnp.concatenate([b1, b2, b3, b4, b5]).astype(jnp.float32)[:, None]
    return {
        "w1": w1p,                                        # (H, Fp)
        "w2": w2.astype(jnp.float32),                     # (H, H)
        "w3": w3.astype(jnp.float32),                     # (2H, H)
        "w4": w4.astype(jnp.float32),                     # (H, 2H)
        "w5c": jnp.transpose(w5).astype(jnp.float32),     # (H, O)
        "bias": bias,                                     # (5H + O, 1)
    }


# ---------------------------------------------------------------------------
# Wrapper: batch-tiled grid, weights resident in VMEM, lane-dense output
# ---------------------------------------------------------------------------
def critic_forward(state, action, kparams, *, max_tile_b=512):
    """state: (B, 24), action: (B, 1, 4) or (B, 4)  ->  (B, output_size) f32."""
    state = state.astype(jnp.float32)
    action = action.astype(jnp.float32)
    if action.ndim == 3:                                  # torch .squeeze(1)
        action = jnp.squeeze(action, axis=1)
    assert state.ndim == 2 and action.ndim == 2 and state.shape[0] == action.shape[0], (
        state.shape, action.shape)

    b, s = state.shape
    a = action.shape[1]
    w1, w2, w3, w4 = kparams["w1"], kparams["w2"], kparams["w3"], kparams["w4"]
    w5c, bias = kparams["w5c"], kparams["bias"]
    fp = w1.shape[1]
    assert s + a <= fp, (s, a, fp)
    out_dim = w5c.shape[1]

    # Pack [state | action | zero lanes] into one row-major slab: one wide DMA
    # stream per grid step instead of two narrow ones.
    pieces = [state, action]
    if fp > s + a:
        pieces.append(jnp.zeros((b, fp - s - a), jnp.float32))
    x = jnp.concatenate(pieces, axis=1)                   # (B, Fp)

    # Batch tiling: big lane-aligned tiles (per-grid-step overhead dominates
    # this tiny MLP), but keep >= 2 steps for large B so both v7x TensorCores
    # are used under dimension_semantics=("parallel",).
    max_tile_b = max(128, (max_tile_b // 128) * 128)
    if b <= 128:
        tile_b = _ceil_to(b, 8)
        bp = tile_b
    else:
        tile_b = min(max_tile_b, _ceil_to(pl.cdiv(b, 2), 128))
        bp = _ceil_to(b, tile_b)
    if bp > b:
        x = jnp.pad(x, ((0, bp - b), (0, 0)))
    grid = (bp // tile_b,)

    def resident(arr):
        # Full-array block, same block index every step -> stays in VMEM.
        return pl.BlockSpec(arr.shape, lambda i: (0, 0))

    in_specs = [
        pl.BlockSpec((tile_b, fp), lambda i: (i, 0)),     # activations: batch-tiled
        resident(w1), resident(w2), resident(w3), resident(w4),
        resident(w5c), resident(bias),
    ]
    # Lane-dense output: (O, Bp) with the batch on lanes -> unmasked stores.
    out_spec = pl.BlockSpec((out_dim, tile_b), lambda i: (0, i))

    out_t = pl.pallas_call(
        critic_kernel,
        out_shape=jax.ShapeDtypeStruct((out_dim, bp), jnp.float32),
        grid=grid,
        in_specs=in_specs,
        out_specs=out_spec,
        compiler_params=pltpu.CompilerParams(
            dimension_semantics=("parallel",)),
    )(x, w1, w2, w3, w4, w5c, bias)

    return out_t[:, :b].T                                 # (B, O)


# ---------------------------------------------------------------------------
# Deterministic PyTorch-style init and pure-JAX reference
# ---------------------------------------------------------------------------
def init_linear(key, fan_in, fan_out):
    kw, kb = jax.random.split(key)
    bound = 1.0 / jnp.sqrt(jnp.float32(fan_in))
    w = jax.random.uniform(kw, (fan_out, fan_in), jnp.float32, -bound, bound)
    b = jax.random.uniform(kb, (fan_out,), jnp.float32, -bound, bound)
    return w, b


def init_critic_params(key, hidden_size, output_size):
    ks = jax.random.split(key, 5)
    return [
        init_linear(ks[0], 28, hidden_size),
        init_linear(ks[1], hidden_size, hidden_size),
        init_linear(ks[2], hidden_size, 2 * hidden_size),
        init_linear(ks[3], 2 * hidden_size, hidden_size),
        init_linear(ks[4], hidden_size, output_size),
    ]


def critic_ref(state, action, params):
    x = jnp.concatenate([state.astype(jnp.float32),
                         jnp.squeeze(action, axis=1).astype(jnp.float32)], axis=1)
    for i, (w, bb) in enumerate(params):
        x = x @ w.T + bb
        if i < len(params) - 1:
            x = jnp.maximum(x, 0.0)
    return x


if __name__ == "__main__":
    key = jax.random.PRNGKey(0)
    k_state, k_action, k_params = jax.random.split(key, 3)

    B = 8
    hidden_size = 32
    output_size = 1

    # state (B, 24) + action (B, 1, 4): concat feature dim = 28, matching the
    # hardcoded first Linear of the module.
    state = jax.random.normal(k_state, (B, 24), jnp.float32)
    action = jax.random.normal(k_action, (B, 1, 4), jnp.float32)

    params = init_critic_params(k_params, hidden_size, output_size)
    kparams = prepare_critic_params(params)

    out = critic_forward(state, action, kparams)
    out = jax.block_until_ready(out)

    ref = critic_ref(state, action, params)
    assert out.shape == (B, output_size), out.shape
    max_err = jnp.max(jnp.abs(out - ref))
    assert jnp.allclose(out, ref, atol=1e-5, rtol=1e-5), f"max abs err {max_err}"

    print("KERNEL_OK")
</pallas_src>

<mosaic_0001>
module attributes {stable_mosaic.version = 11 : i64} {
  func.func @critic_kernel(%arg0: i32, %arg1: memref<8x32xf32, #tpu.memory_space<vmem>>, %arg2: memref<32x32xf32, #tpu.memory_space<vmem>>, %arg3: memref<32x32xf32, #tpu.memory_space<vmem>>, %arg4: memref<64x32xf32, #tpu.memory_space<vmem>>, %arg5: memref<32x64xf32, #tpu.memory_space<vmem>>, %arg6: memref<32x1xf32, #tpu.memory_space<vmem>>, %arg7: memref<161x1xf32, #tpu.memory_space<vmem>>, %arg8: memref<1x8xf32, #tpu.memory_space<vmem>>) attributes {dimension_semantics = [#tpu.dimension_semantics<parallel>], iteration_bounds = array<i64: 1>, scalar_prefetch = 0 : i64, scratch_operands = 0 : i64, tpu.core_type = #tpu.core_type<tc>, window_params = [{transform_indices = @transform_0, window_bounds = array<i64: 8, 32>}, {pipeline_mode = #tpu.pipeline_mode<synchronous>, transform_indices = @transform_1, window_bounds = array<i64: 32, 32>}, {pipeline_mode = #tpu.pipeline_mode<synchronous>, transform_indices = @transform_2, window_bounds = array<i64: 32, 32>}, {pipeline_mode = #tpu.pipeline_mode<synchronous>, transform_indices = @transform_3, window_bounds = array<i64: 64, 32>}, {pipeline_mode = #tpu.pipeline_mode<synchronous>, transform_indices = @transform_4, window_bounds = array<i64: 32, 64>}, {pipeline_mode = #tpu.pipeline_mode<synchronous>, transform_indices = @transform_5, window_bounds = array<i64: 32, 1>}, {pipeline_mode = #tpu.pipeline_mode<synchronous>, transform_indices = @transform_6, window_bounds = array<i64: 161, 1>}, {transform_indices = @transform_7, window_bounds = array<i64: 1, 8>}]} {
    %c0 = arith.constant 0 : index
    %c0_0 = arith.constant 0 : index
    %0 = vector.load %arg7[%c0, %c0_0] : memref<161x1xf32, #tpu.memory_space<vmem>>, vector<32x1xf32>
    %c32 = arith.constant 32 : index
    %c0_1 = arith.constant 0 : index
    %1 = vector.load %arg7[%c32, %c0_1] : memref<161x1xf32, #tpu.memory_space<vmem>>, vector<32x1xf32>
    %c64 = arith.constant 64 : index
    %c0_2 = arith.constant 0 : index
    %2 = vector.load %arg7[%c64, %c0_2] : memref<161x1xf32, #tpu.memory_space<vmem>>, vector<64x1xf32>
    %c128 = arith.constant 128 : index
    %c0_3 = arith.constant 0 : index
    %3 = vector.load %arg7[%c128, %c0_3] : memref<161x1xf32, #tpu.memory_space<vmem>>, vector<32x1xf32>
    %c160 = arith.constant 160 : index
    %c0_4 = arith.constant 0 : index
    %4 = vector.load %arg7[%c160, %c0_4] : memref<161x1xf32, #tpu.memory_space<vmem>>, vector<1x1xf32>
    %c0_5 = arith.constant 0 : index
    %c0_6 = arith.constant 0 : index
    %5 = vector.load %arg1[%c0_5, %c0_6] : memref<8x32xf32, #tpu.memory_space<vmem>>, vector<8x32xf32>
    %c0_7 = arith.constant 0 : index
    %c0_8 = arith.constant 0 : index
    %6 = vector.load %arg2[%c0_7, %c0_8] : memref<32x32xf32, #tpu.memory_space<vmem>>, vector<32x32xf32>
    %cst = arith.constant dense<0.000000e+00> : vector<32x8xf32>
    %7 = tpu.matmul %6, %5, %cst {dimension_numbers = #tpu.dot_dimension_numbers<[1], [1], [0], [0], [0, 0, 1, 0], [], []>} : vector<32x32xf32>, vector<8x32xf32>, vector<32x8xf32> -> vector<32x8xf32>
    %8 = vector.broadcast %0 : vector<32x1xf32> to vector<32x8xf32>
    %9 = arith.addf %7, %8 : vector<32x8xf32>
    %cst_9 = arith.constant 0.000000e+00 : f32
    %10 = vector.broadcast %cst_9 : f32 to vector<32x8xf32>
    %11 = arith.maximumf %9, %10 : vector<32x8xf32>
    %c0_10 = arith.constant 0 : index
    %c0_11 = arith.constant 0 : index
    %12 = vector.load %arg3[%c0_10, %c0_11] : memref<32x32xf32, #tpu.memory_space<vmem>>, vector<32x32xf32>
    %cst_12 = arith.constant dense<0.000000e+00> : vector<32x8xf32>
    %13 = tpu.matmul %12, %11, %cst_12 {dimension_numbers = #tpu.dot_dimension_numbers<[1], [0], [0], [1], [0, 0, 1, 1], [], []>} : vector<32x32xf32>, vector<32x8xf32>, vector<32x8xf32> -> vector<32x8xf32>
    %14 = vector.broadcast %1 : vector<32x1xf32> to vector<32x8xf32>
    %15 = arith.addf %13, %14 : vector<32x8xf32>
    %cst_13 = arith.constant 0.000000e+00 : f32
    %16 = vector.broadcast %cst_13 : f32 to vector<32x8xf32>
    %17 = arith.maximumf %15, %16 : vector<32x8xf32>
    %c0_14 = arith.constant 0 : index
    %c0_15 = arith.constant 0 : index
    %18 = vector.load %arg4[%c0_14, %c0_15] : memref<64x32xf32, #tpu.memory_space<vmem>>, vector<64x32xf32>
    %cst_16 = arith.constant dense<0.000000e+00> : vector<64x8xf32>
    %19 = tpu.matmul %18, %17, %cst_16 {dimension_numbers = #tpu.dot_dimension_numbers<[1], [0], [0], [1], [0, 0, 1, 1], [], []>} : vector<64x32xf32>, vector<32x8xf32>, vector<64x8xf32> -> vector<64x8xf32>
    %20 = vector.broadcast %2 : vector<64x1xf32> to vector<64x8xf32>
    %21 = arith.addf %19, %20 : vector<64x8xf32>
    %cst_17 = arith.constant 0.000000e+00 : f32
    %22 = vector.broadcast %cst_17 : f32 to vector<64x8xf32>
    %23 = arith.maximumf %21, %22 : vector<64x8xf32>
    %c0_18 = arith.constant 0 : index
    %c0_19 = arith.constant 0 : index
    %24 = vector.load %arg5[%c0_18, %c0_19] : memref<32x64xf32, #tpu.memory_space<vmem>>, vector<32x64xf32>
    %cst_20 = arith.constant dense<0.000000e+00> : vector<32x8xf32>
    %25 = tpu.matmul %24, %23, %cst_20 {dimension_numbers = #tpu.dot_dimension_numbers<[1], [0], [0], [1], [0, 0, 1, 1], [], []>} : vector<32x64xf32>, vector<64x8xf32>, vector<32x8xf32> -> vector<32x8xf32>
    %26 = vector.broadcast %3 : vector<32x1xf32> to vector<32x8xf32>
    %27 = arith.addf %25, %26 : vector<32x8xf32>
    %cst_21 = arith.constant 0.000000e+00 : f32
    %28 = vector.broadcast %cst_21 : f32 to vector<32x8xf32>
    %29 = arith.maximumf %27, %28 : vector<32x8xf32>
    %c0_22 = arith.constant 0 : index
    %c0_23 = arith.constant 0 : index
    %30 = vector.load %arg6[%c0_22, %c0_23] : memref<32x1xf32, #tpu.memory_space<vmem>>, vector<32x1xf32>
    %31 = vector.broadcast %30 : vector<32x1xf32> to vector<32x8xf32>
    %32 = arith.mulf %29, %31 : vector<32x8xf32>
    %cst_24 = arith.constant dense<0.000000e+00> : vector<8xf32>
    %33 = vector.multi_reduction <add>, %32, %cst_24 [0] : vector<32x8xf32> to vector<8xf32>
    %34 = vector.shape_cast %33 : vector<8xf32> to vector<1x8xf32>
    %35 = vector.broadcast %4 : vector<1x1xf32> to vector<1x8xf32>
    %36 = arith.addf %34, %35 : vector<1x8xf32>
    %c0_25 = arith.constant 0 : index
    %c0_26 = arith.constant 0 : index
    %37 = vector.load %arg8[%c0_25, %c0_26] : memref<1x8xf32, #tpu.memory_space<vmem>>, vector<1x8xf32>
    tpu.vector_store %arg8[%c0_25, %c0_26], %36 {strides = array<i32>} : memref<1x8xf32, #tpu.memory_space<vmem>>, vector<1x8xf32>,
    return
  }
  func.func @transform_0(%arg0: i32) -> (i32, i32) {
    %c0_i32 = arith.constant 0 : i32
    %c0_i32_0 = arith.constant 0 : i32
    return %arg0, %c0_i32 : i32, i32
  }
  func.func @transform_1(%arg0: i32) -> (i32, i32) {
    %c0_i32 = arith.constant 0 : i32
    %c0_i32_0 = arith.constant 0 : i32
    %c0_i32_1 = arith.constant 0 : i32
    return %c0_i32, %c0_i32_0 : i32, i32
  }
  func.func @transform_2(%arg0: i32) -> (i32, i32) {
    %c0_i32 = arith.constant 0 : i32
    %c0_i32_0 = arith.constant 0 : i32
    %c0_i32_1 = arith.constant 0 : i32
    return %c0_i32, %c0_i32_0 : i32, i32
  }
  func.func @transform_3(%arg0: i32) -> (i32, i32) {
    %c0_i32 = arith.constant 0 : i32
    %c0_i32_0 = arith.constant 0 : i32
    %c0_i32_1 = arith.constant 0 : i32
    return %c0_i32, %c0_i32_0 : i32, i32
  }
  func.func @transform_4(%arg0: i32) -> (i32, i32) {
    %c0_i32 = arith.constant 0 : i32
    %c0_i32_0 = arith.constant 0 : i32
    %c0_i32_1 = arith.constant 0 : i32
    return %c0_i32, %c0_i32_0 : i32, i32
  }
  func.func @transform_5(%arg0: i32) -> (i32, i32) {
    %c0_i32 = arith.constant 0 : i32
    %c0_i32_0 = arith.constant 0 : i32
    %c0_i32_1 = arith.constant 0 : i32
    return %c0_i32, %c0_i32_0 : i32, i32
  }
  func.func @transform_6(%arg0: i32) -> (i32, i32) {
    %c0_i32 = arith.constant 0 : i32
    %c0_i32_0 = arith.constant 0 : i32
    %c0_i32_1 = arith.constant 0 : i32
    return %c0_i32, %c0_i32_0 : i32, i32
  }
  func.func @transform_7(%arg0: i32) -> (i32, i32) {
    %c0_i32 = arith.constant 0 : i32
    %c0_i32_0 = arith.constant 0 : i32
    return %c0_i32, %arg0 : i32, i32
  }
}

</mosaic_0001>

<llo_original>
// kernel: tpu_custom_call.1
$region0: #{tpu_custom_call.1}
  #allocation0 [shape = 'u32[]', space=smem, size = 0x4, offset = 0x4, fixed_abs, tag = 'smem constant byte address 0x4 - core index']
  #allocation1 [shape = 'u32[144,128]{1,0:T(1,128)}', space=vmem, size = 0x12000, scoped, tag = 'internal scratch']
  %s0 = inlined_call_operand.vmem [shape: f32[8,32], index: 0, kind: input, shape index: {}]
  %s1 = inlined_call_operand.vmem [shape: f32[32,32], index: 1, kind: input, shape index: {}]
  %s2 = inlined_call_operand.vmem [shape: f32[32,32], index: 2, kind: input, shape index: {}]
  %s3 = inlined_call_operand.vmem [shape: f32[64,32], index: 3, kind: input, shape index: {}]
  %s4 = inlined_call_operand.vmem [shape: f32[32,64], index: 4, kind: input, shape index: {}]
  %s5 = inlined_call_operand.vmem [shape: f32[32,1], index: 5, kind: input, shape index: {}]
  %s6 = inlined_call_operand.vmem [shape: f32[161,1], index: 6, kind: input, shape index: {}]
  %s7 = inlined_call_operand.hbm [shape: f32[1,8], index: 7, kind: output, shape index: {}]
  %s8 = sld [smem:[#allocation0]]
  $region38: #{tpu_custom_call.1} parent=0
    _
  %s10 = ssub.s32 1, %s8
  %s11 = scalar_select 0, %s10, %s8
  $region1: #{tpu_custom_call.1} parent=0
    #allocation2 [shape = 'u8[512]{0}', space=vmem, size = 0x400, scoped, tag = 'output window, operand 0, single buffered']
    #allocation3 [shape = 's32[1]{0}', space=sflag, size = 0x4, scoped, tag = 'scoped memory for tpu_custom_call.1']
    %12 = vsyncpa [#allocation3], 0
    // Predicated region
    $region2: #{tpu_custom_call.1} parent=1 // pred_check
      _
    $region3: #{tpu_custom_call.1} parent=1 // pred_check_branch
      %14 = sbr.rel (0) target = $region5
    $region4: #{tpu_custom_call.1} parent=1 // pred_region
      _
    $region5: #{tpu_custom_call.1} parent=1 // pred_fallthru
      _
    // Predicated region
    $region6: #{tpu_custom_call.1} parent=1 // pred_check
      _
    $region7: #{tpu_custom_call.1} parent=1 // pred_check_branch
      %16 = sbr.rel (0) target = $region9
    $region8: #{tpu_custom_call.1} parent=1 // pred_region
      _
    $region9: #{tpu_custom_call.1} parent=1 // pred_fallthru
      _
    // Predicated region
    $region10: #{tpu_custom_call.1} parent=1 // pred_check
      _
    $region11: #{tpu_custom_call.1} parent=1 // pred_check_branch
      %18 = sbr.rel (0) target = $region13
    $region12: #{tpu_custom_call.1} parent=1 // pred_region
      _
    $region13: #{tpu_custom_call.1} parent=1 // pred_fallthru
      _
    // Predicated region
    $region14: #{tpu_custom_call.1} parent=1 // pred_check
      _
    $region15: #{tpu_custom_call.1} parent=1 // pred_check_branch
      %20 = sbr.rel (0) target = $region17
    $region16: #{tpu_custom_call.1} parent=1 // pred_region
      _
    $region17: #{tpu_custom_call.1} parent=1 // pred_fallthru
      _
    // Predicated region
    $region18: #{tpu_custom_call.1} parent=1 // pred_check
      _
    $region19: #{tpu_custom_call.1} parent=1 // pred_check_branch
      %22 = sbr.rel (0) target = $region21
    $region20: #{tpu_custom_call.1} parent=1 // pred_region
      _
    $region21: #{tpu_custom_call.1} parent=1 // pred_fallthru
      _
    // Predicated region
    $region22: #{tpu_custom_call.1} parent=1 // pred_check
      _
    $region23: #{tpu_custom_call.1} parent=1 // pred_check_branch
      %24 = sbr.rel (0) target = $region25
    $region24: #{tpu_custom_call.1} parent=1 // pred_region
      _
    $region25: #{tpu_custom_call.1} parent=1 // pred_fallthru
      _
    // Predicated region
    $region26: #{tpu_custom_call.1} parent=1 // pred_check
      _
    $region27: #{tpu_custom_call.1} parent=1 // pred_check_branch
      %26 = sbr.rel (0) target = $region29
    $region28: #{tpu_custom_call.1} parent=1 // pred_region
      _
    $region29: #{tpu_custom_call.1} parent=1 // pred_fallthru
      _
    %v27 = vld [vmem:[%s6] sm:$0xff]
    %v28 = vld [vmem:[%s6 + $0x8] sm:$0xff]
    %v29 = vld [vmem:[%s6 + $0x10] sm:$0xff]
    %v30 = vld [vmem:[%s6 + $0x18] sm:$0xff]
    %v31 = vld [vmem:[%s6 + $0x20] sm:$0xff]
    %v32 = vld [vmem:[%s6 + $0x28] sm:$0xff]
    %v33 = vld [vmem:[%s6 + $0x30] sm:$0xff]
    %v34 = vld [vmem:[%s6 + $0x38] sm:$0xff]
    %v35 = vld [vmem:[%s6 + $0x40] sm:$0xff]
    %v36 = vld [vmem:[%s6 + $0x48] sm:$0xff]
    %v37 = vld [vmem:[%s6 + $0x50] sm:$0xff]
    %v38 = vld [vmem:[%s6 + $0x58] sm:$0xff]
    %v39 = vld [vmem:[%s6 + $0x60] sm:$0xff]
    %v40 = vld [vmem:[%s6 + $0x68] sm:$0xff]
    %v41 = vld [vmem:[%s6 + $0x70] sm:$0xff]
    %v42 = vld [vmem:[%s6 + $0x78] sm:$0xff]
    %v43 = vld [vmem:[%s6 + $0x80] sm:$0xff]
    %v44 = vld [vmem:[%s6 + $0x88] sm:$0xff]
    %v45 = vld [vmem:[%s6 + $0x90] sm:$0xff]
    %v46 = vld [vmem:[%s6 + $0x98] sm:$0xff]
    %v47 = vld [vmem:[%s6 + $0xa0] sm:$0x1]
    %v48 = vld [vmem:[%s0] sm:$0xff]
    %v49 = vld [vmem:[%s1] sm:$0xff]
    %v50 = vld [vmem:[%s1 + $0x8] sm:$0xff]
    %v51 = vld [vmem:[%s1 + $0x10] sm:$0xff]
    %v52 = vld [vmem:[%s1 + $0x18] sm:$0xff]
    %54 = vset.pattern.permute.xlu0 0
    %55 = vperm.xlu0 %54, %v27
    %v56 = vpop.permute.xlu0 %55
    %59 = vset.pattern.permute.xlu0 0
    %60 = vperm.xlu0 %59, %v28
    %v61 = vpop.permute.xlu0 %60
    %64 = vset.pattern.permute.xlu0 0
    %65 = vperm.xlu0 %64, %v29
    %v66 = vpop.permute.xlu0 %65
    %69 = vset.pattern.permute.xlu0 0
    %70 = vperm.xlu0 %69, %v30
    %v71 = vpop.permute.xlu0 %70
    %vm73 = vcmask 261120
    %v75 = vsel %vm73, %v49, 0
    %v78 = vsel %vm73, %v50, 0
    %v81 = vsel %vm73, %v51, 0
    %v84 = vsel %vm73, %v52, 0
    %v87 = vsel %vm73, %v48, 0
    %89 = vmatprep.subr.mxu0 0.0
    %90 = vmatpush1.xpose.msra.mxu0 0.0
    %91 = vmatprep.subr.mxu0 0.0
    %92 = vmatpush1.xpose.msra.mxu0 0.0
    %93 = vmatprep.subr.mxu0 0.0
    %94 = vmatpush1.xpose.msra.mxu0 0.0
    %95 = vmatprep.subr.mxu0 0.0
    %96 = vmatpush1.xpose.msra.mxu0 0.0
    %97 = vmatprep.subr.mxu0 0.0
    %98 = vmatpush1.xpose.msra.mxu0 0.0
    %99 = vmatprep.subr.mxu0 0.0
    %100 = vmatpush1.xpose.msra.mxu0 0.0
    %101 = vmatprep.subr.mxu0 0.0
    %102 = vmatpush1.xpose.msra.mxu0 0.0
    %103 = vmatprep.subr.mxu0 0.0
    %104 = vmatpush1.xpose.msra.mxu0 0.0
    %105 = vmatprep.subr.mxu0 0.0
    %106 = vmatpush1.xpose.msra.mxu0 0.0
    %107 = vmatprep.subr.mxu0 0.0
    %108 = vmatpush1.xpose.msra.mxu0 0.0
    %109 = vmatprep.subr.mxu0 0.0
    %110 = vmatpush1.xpose.msra.mxu0 0.0
    %111 = vmatprep.subr.mxu0 0.0
    %112 = vmatpush1.xpose.msra.mxu0 0.0
    %113 = vmatprep.subr.mxu0 0.0
    %114 = vmatpush1.xpose.msra.mxu0 0.0
    %115 = vmatprep.subr.mxu0 0.0
    %116 = vmatpush1.xpose.msra.mxu0 0.0
    %117 = vmatprep.subr.mxu0 0.0
    %118 = vmatpush1.xpose.msra.mxu0 0.0
    %119 = vmatprep.subr.mxu0 0.0
    %120 = vmatpush1.xpose.msra.mxu0 %v87
    %121 = vmatprep.subr.mxu0 0.0
    %122 = vmatpush2.xpose.msra.mxu0 0.0
    %123 = vmatprep.subr.mxu0 0.0
    %124 = vmatpush2.xpose.msra.mxu0 0.0
    %125 = vmatprep.subr.mxu0 0.0
    %126 = vmatpush2.xpose.msra.mxu0 0.0
    %127 = vmatprep.subr.mxu0 0.0
    %128 = vmatpush2.xpose.msra.mxu0 0.0
    %129 = vmatprep.subr.mxu0 0.0
    %130 = vmatpush2.xpose.msra.mxu0 0.0
    %131 = vmatprep.subr.mxu0 0.0
    %132 = vmatpush2.xpose.msra.mxu0 0.0
    %133 = vmatprep.subr.mxu0 0.0
    %134 = vmatpush2.xpose.msra.mxu0 0.0
    %135 = vmatprep.subr.mxu0 0.0
    %136 = vmatpush2.xpose.msra.mxu0 0.0
    %137 = vmatprep.subr.mxu0 0.0
    %138 = vmatpush2.xpose.msra.mxu0 0.0
    %139 = vmatprep.subr.mxu0 0.0
    %140 = vmatpush2.xpose.msra.mxu0 0.0
    %141 = vmatprep.subr.mxu0 0.0
    %142 = vmatpush2.xpose.msra.mxu0 0.0
    %143 = vmatprep.subr.mxu0 0.0
    %144 = vmatpush2.xpose.msra.mxu0 0.0
    %145 = vmatprep.subr.mxu0 0.0
    %146 = vmatpush2.xpose.msra.mxu0 0.0
    %147 = vmatprep.subr.mxu0 0.0
    %148 = vmatpush2.xpose.msra.mxu0 0.0
    %149 = vmatprep.subr.mxu0 0.0
    %150 = vmatpush2.xpose.msra.mxu0 0.0
    %151 = vmatprep.subr.mxu0 0.0
    %152 = vmatpush2.xpose.msra.mxu0 0.0
    %153 = vmatprep.mubr.f32.mxu0 0.0
    %154 = vmatmul.mubr.f32.gmra.mxu0 %v75
    %v155 = vpop.f32.mrf.mxu0
    %v156 = vadd.f32 %v56, %v155
    %v157 = vpop.f32.mrf.mxu0
    %158 = vmatprep.mubr.f32.mxu0 0.0
    %159 = vmatmul.mubr.f32.gmra.mxu0 %v78
    %v160 = vpop.f32.mrf.mxu0
    %v161 = vadd.f32 %v61, %v160
    %v162 = vpop.f32.mrf.mxu0
    %163 = vmatprep.mubr.f32.mxu0 0.0
    %164 = vmatmul.mubr.f32.gmra.mxu0 %v81
    %v165 = vpop.f32.mrf.mxu0
    %v166 = vadd.f32 %v66, %v165
    %v167 = vpop.f32.mrf.mxu0
    %168 = vmatprep.mubr.f32.mxu0 0.0
    %169 = vmatmul.mubr.f32.gmra.mxu0 %v84
    %v170 = vpop.f32.mrf.mxu0
    %v171 = vadd.f32 %v71, %v170
    %v172 = vpop.f32.mrf.mxu0
    %173 = vdwg.mxu0
    %v174 = vmax.f32 %v156, 0.0
    %v175 = vmax.f32 %v161, 0.0
    %v176 = vmax.f32 %v166, 0.0
    %v177 = vmax.f32 %v171, 0.0
    %v178 = vld [vmem:[%s2] sm:$0xff]
    %v179 = vld [vmem:[%s2 + $0x8] sm:$0xff]
    %v180 = vld [vmem:[%s2 + $0x10] sm:$0xff]
    %v181 = vld [vmem:[%s2 + $0x18] sm:$0xff]
    %183 = vset.pattern.permute.xlu0 0
    %184 = vperm.xlu0 %183, %v31
    %v185 = vpop.permute.xlu0 %184
    %188 = vset.pattern.permute.xlu0 0
    %189 = vperm.xlu0 %188, %v32
    %v190 = vpop.permute.xlu0 %189
    %193 = vset.pattern.permute.xlu0 0
    %194 = vperm.xlu0 %193, %v33
    %v195 = vpop.permute.xlu0 %194
    %198 = vset.pattern.permute.xlu0 0
    %199 = vperm.xlu0 %198, %v34
    %v200 = vpop.permute.xlu0 %199
    %v203 = vsel %vm73, %v178, 0
    %v206 = vsel %vm73, %v179, 0
    %v209 = vsel %vm73, %v180, 0
    %v212 = vsel %vm73, %v181, 0
    %214 = vmatprep.subr.mxu0 0.0
    %215 = vmatpush1.msra.mxu0 0.0
    %216 = vmatprep.subr.mxu0 0.0
    %217 = vmatpush1.msra.mxu0 0.0
    %218 = vmatprep.subr.mxu0 0.0
    %219 = vmatpush1.msra.mxu0 0.0
    %220 = vmatprep.subr.mxu0 0.0
    %221 = vmatpush1.msra.mxu0 0.0
    %222 = vmatprep.subr.mxu0 0.0
    %223 = vmatpush1.msra.mxu0 0.0
    %224 = vmatprep.subr.mxu0 0.0
    %225 = vmatpush1.msra.mxu0 0.0
    %226 = vmatprep.subr.mxu0 0.0
    %227 = vmatpush1.msra.mxu0 0.0
    %228 = vmatprep.subr.mxu0 0.0
    %229 = vmatpush1.msra.mxu0 0.0
    %230 = vmatprep.subr.mxu0 0.0
    %231 = vmatpush1.msra.mxu0 0.0
    %232 = vmatprep.subr.mxu0 0.0
    %233 = vmatpush1.msra.mxu0 0.0
    %234 = vmatprep.subr.mxu0 0.0
    %235 = vmatpush1.msra.mxu0 0.0
    %236 = vmatprep.subr.mxu0 0.0
    %237 = vmatpush1.msra.mxu0 0.0
    %238 = vmatprep.subr.mxu0 0.0
    %239 = vmatpush1.msra.mxu0 %v177
    %240 = vmatprep.subr.mxu0 0.0
    %241 = vmatpush1.msra.mxu0 %v176
    %242 = vmatprep.subr.mxu0 0.0
    %243 = vmatpush1.msra.mxu0 %v175
    %244 = vmatprep.subr.mxu0 0.0
    %245 = vmatpush1.msra.mxu0 %v174
    %246 = vmatprep.subr.mxu0 0.0
    %247 = vmatpush2.msra.mxu0 0.0
    %248 = vmatprep.subr.mxu0 0.0
    %249 = vmatpush2.msra.mxu0 0.0
    %250 = vmatprep.subr.mxu0 0.0
    %251 = vmatpush2.msra.mxu0 0.0
    %252 = vmatprep.subr.mxu0 0.0
    %253 = vmatpush2.msra.mxu0 0.0
    %254 = vmatprep.subr.mxu0 0.0
    %255 = vmatpush2.msra.mxu0 0.0
    %256 = vmatprep.subr.mxu0 0.0
    %257 = vmatpush2.msra.mxu0 0.0
    %258 = vmatprep.subr.mxu0 0.0
    %259 = vmatpush2.msra.mxu0 0.0
    %260 = vmatprep.subr.mxu0 0.0
    %261 = vmatpush2.msra.mxu0 0.0
    %262 = vmatprep.subr.mxu0 0.0
    %263 = vmatpush2.msra.mxu0 0.0
    %264 = vmatprep.subr.mxu0 0.0
    %265 = vmatpush2.msra.mxu0 0.0
    %266 = vmatprep.subr.mxu0 0.0
    %267 = vmatpush2.msra.mxu0 0.0
    %268 = vmatprep.subr.mxu0 0.0
    %269 = vmatpush2.msra.mxu0 0.0
    %270 = vmatprep.subr.mxu0 0.0
    %271 = vmatpush2.msra.mxu0 0.0
    %272 = vmatprep.subr.mxu0 0.0
    %273 = vmatpush2.msra.mxu0 0.0
    %274 = vmatprep.subr.mxu0 0.0
    %275 = vmatpush2.msra.mxu0 0.0
    %276 = vmatprep.subr.mxu0 0.0
    %277 = vmatpush2.msra.mxu0 0.0
    %278 = vmatprep.mubr.f32.mxu0 0.0
    %279 = vmatmul.mubr.f32.gmra.mxu0 %v203
    %v280 = vpop.f32.mrf.mxu0
    %v281 = vadd.f32 %v185, %v280
    %v282 = vpop.f32.mrf.mxu0
    %283 = vmatprep.mubr.f32.mxu0 0.0
    %284 = vmatmul.mubr.f32.gmra.mxu0 %v206
    %v285 = vpop.f32.mrf.mxu0
    %v286 = vadd.f32 %v190, %v285
    %v287 = vpop.f32.mrf.mxu0
    %288 = vmatprep.mubr.f32.mxu0 0.0
    %289 = vmatmul.mubr.f32.gmra.mxu0 %v209
    %v290 = vpop.f32.mrf.mxu0
    %v291 = vadd.f32 %v195, %v290
    %v292 = vpop.f32.mrf.mxu0
    %293 = vmatprep.mubr.f32.mxu0 0.0
    %294 = vmatmul.mubr.f32.gmra.mxu0 %v212
    %v295 = vpop.f32.mrf.mxu0
    %v296 = vadd.f32 %v200, %v295
    %v297 = vpop.f32.mrf.mxu0
    %298 = vdwg.mxu0
    %v299 = vmax.f32 %v281, 0.0
    %v300 = vmax.f32 %v286, 0.0
    %v301 = vmax.f32 %v291, 0.0
    %v302 = vmax.f32 %v296, 0.0
    %v303 = vld [vmem:[%s3] sm:$0xff]
    %v304 = vld [vmem:[%s3 + $0x8] sm:$0xff]
    %v305 = vld [vmem:[%s3 + $0x10] sm:$0xff]
    %v306 = vld [vmem:[%s3 + $0x18] sm:$0xff]
    %v307 = vld [vmem:[%s3 + $0x20] sm:$0xff]
    %v308 = vld [vmem:[%s3 + $0x28] sm:$0xff]
    %v309 = vld [vmem:[%s3 + $0x30] sm:$0xff]
    %v310 = vld [vmem:[%s3 + $0x38] sm:$0xff]
    %312 = vset.pattern.permute.xlu0 0
    %313 = vperm.xlu0 %312, %v35
    %v314 = vpop.permute.xlu0 %313
    %317 = vset.pattern.permute.xlu0 0
    %318 = vperm.xlu0 %317, %v36
    %v319 = vpop.permute.xlu0 %318
    %322 = vset.pattern.permute.xlu0 0
    %323 = vperm.xlu0 %322, %v37
    %v324 = vpop.permute.xlu0 %323
    %327 = vset.pattern.permute.xlu0 0
    %328 = vperm.xlu0 %327, %v38
    %v329 = vpop.permute.xlu0 %328
    %332 = vset.pattern.permute.xlu0 0
    %333 = vperm.xlu0 %332, %v39
    %v334 = vpop.permute.xlu0 %333
    %337 = vset.pattern.permute.xlu0 0
    %338 = vperm.xlu0 %337, %v40
    %v339 = vpop.permute.xlu0 %338
    %342 = vset.pattern.permute.xlu0 0
    %343 = vperm.xlu0 %342, %v41
    %v344 = vpop.permute.xlu0 %343
    %347 = vset.pattern.permute.xlu0 0
    %348 = vperm.xlu0 %347, %v42
    %v349 = vpop.permute.xlu0 %348
    %v352 = vsel %vm73, %v303, 0
    %v355 = vsel %vm73, %v304, 0
    %v358 = vsel %vm73, %v305, 0
    %v361 = vsel %vm73, %v306, 0
    %v364 = vsel %vm73, %v307, 0
    %v367 = vsel %vm73, %v308, 0
    %v370 = vsel %vm73, %v309, 0
    %v373 = vsel %vm73, %v310, 0
    %375 = vmatprep.subr.mxu0 0.0
    %376 = vmatpush1.msra.mxu0 0.0
    %377 = vmatprep.subr.mxu0 0.0
    %378 = vmatpush1.msra.mxu0 0.0
    %379 = vmatprep.subr.mxu0 0.0
    %380 = vmatpush1.msra.mxu0 0.0
    %381 = vmatprep.subr.mxu0 0.0
    %382 = vmatpush1.msra.mxu0 0.0
    %383 = vmatprep.subr.mxu0 0.0
    %384 = vmatpush1.msra.mxu0 0.0
    %385 = vmatprep.subr.mxu0 0.0
    %386 = vmatpush1.msra.mxu0 0.0
    %387 = vmatprep.subr.mxu0 0.0
    %388 = vmatpush1.msra.mxu0 0.0
    %389 = vmatprep.subr.mxu0 0.0
    %390 = vmatpush1.msra.mxu0 0.0
    %391 = vmatprep.subr.mxu0 0.0
    %392 = vmatpush1.msra.mxu0 0.0
    %393 = vmatprep.subr.mxu0 0.0
    %394 = vmatpush1.msra.mxu0 0.0
    %395 = vmatprep.subr.mxu0 0.0
    %396 = vmatpush1.msra.mxu0 0.0
    %397 = vmatprep.subr.mxu0 0.0
    %398 = vmatpush1.msra.mxu0 0.0
    %399 = vmatprep.subr.mxu0 0.0
    %400 = vmatpush1.msra.mxu0 %v302
    %401 = vmatprep.subr.mxu0 0.0
    %402 = vmatpush1.msra.mxu0 %v301
    %403 = vmatprep.subr.mxu0 0.0
    %404 = vmatpush1.msra.mxu0 %v300
    %405 = vmatprep.subr.mxu0 0.0
    %406 = vmatpush1.msra.mxu0 %v299
    %407 = vmatprep.subr.mxu0 0.0
    %408 = vmatpush2.msra.mxu0 0.0
    %409 = vmatprep.subr.mxu0 0.0
    %410 = vmatpush2.msra.mxu0 0.0
    %411 = vmatprep.subr.mxu0 0.0
    %412 = vmatpush2.msra.mxu0 0.0
    %413 = vmatprep.subr.mxu0 0.0
    %414 = vmatpush2.msra.mxu0 0.0
    %415 = vmatprep.subr.mxu0 0.0
    %416 = vmatpush2.msra.mxu0 0.0
    %417 = vmatprep.subr.mxu0 0.0
    %418 = vmatpush2.msra.mxu0 0.0
    %419 = vmatprep.subr.mxu0 0.0
    %420 = vmatpush2.msra.mxu0 0.0
    %421 = vmatprep.subr.mxu0 0.0
    %422 = vmatpush2.msra.mxu0 0.0
    %423 = vmatprep.subr.mxu0 0.0
    %424 = vmatpush2.msra.mxu0 0.0
    %425 = vmatprep.subr.mxu0 0.0
    %426 = vmatpush2.msra.mxu0 0.0
    %427 = vmatprep.subr.mxu0 0.0
    %428 = vmatpush2.msra.mxu0 0.0
    %429 = vmatprep.subr.mxu0 0.0
    %430 = vmatpush2.msra.mxu0 0.0
    %431 = vmatprep.subr.mxu0 0.0
    %432 = vmatpush2.msra.mxu0 0.0
    %433 = vmatprep.subr.mxu0 0.0
    %434 = vmatpush2.msra.mxu0 0.0
    %435 = vmatprep.subr.mxu0 0.0
    %436 = vmatpush2.msra.mxu0 0.0
    %437 = vmatprep.subr.mxu0 0.0
    %438 = vmatpush2.msra.mxu0 0.0
    %439 = vmatprep.mubr.f32.mxu0 0.0
    %440 = vmatmul.mubr.f32.gmra.mxu0 %v352
    %v441 = vpop.f32.mrf.mxu0
    %v442 = vadd.f32 %v314, %v441
    %v443 = vpop.f32.mrf.mxu0
    %444 = vmatprep.mubr.f32.mxu0 0.0
    %445 = vmatmul.mubr.f32.gmra.mxu0 %v355
    %v446 = vpop.f32.mrf.mxu0
    %v447 = vadd.f32 %v319, %v446
    %v448 = vpop.f32.mrf.mxu0
    %449 = vmatprep.mubr.f32.mxu0 0.0
    %450 = vmatmul.mubr.f32.gmra.mxu0 %v358
    %v451 = vpop.f32.mrf.mxu0
    %v452 = vadd.f32 %v324, %v451
    %v453 = vpop.f32.mrf.mxu0
    %454 = vmatprep.mubr.f32.mxu0 0.0
    %455 = vmatmul.mubr.f32.gmra.mxu0 %v361
    %v456 = vpop.f32.mrf.mxu0
    %v457 = vadd.f32 %v329, %v456
    %v458 = vpop.f32.mrf.mxu0
    %459 = vmatprep.mubr.f32.mxu0 0.0
    %460 = vmatmul.mubr.f32.gmra.mxu0 %v364
    %v461 = vpop.f32.mrf.mxu0
    %v462 = vadd.f32 %v334, %v461
    %v463 = vpop.f32.mrf.mxu0
    %464 = vmatprep.mubr.f32.mxu0 0.0
    %465 = vmatmul.mubr.f32.gmra.mxu0 %v367
    %v466 = vpop.f32.mrf.mxu0
    %v467 = vadd.f32 %v339, %v466
    %v468 = vpop.f32.mrf.mxu0
    %469 = vmatprep.mubr.f32.mxu0 0.0
    %470 = vmatmul.mubr.f32.gmra.mxu0 %v370
    %v471 = vpop.f32.mrf.mxu0
    %v472 = vadd.f32 %v344, %v471
    %v473 = vpop.f32.mrf.mxu0
    %474 = vmatprep.mubr.f32.mxu0 0.0
    %475 = vmatmul.mubr.f32.gmra.mxu0 %v373
    %v476 = vpop.f32.mrf.mxu0
    %v477 = vadd.f32 %v349, %v476
    %v478 = vpop.f32.mrf.mxu0
    %479 = vdwg.mxu0
    %v480 = vmax.f32 %v442, 0.0
    %v481 = vmax.f32 %v447, 0.0
    %v482 = vmax.f32 %v452, 0.0
    %v483 = vmax.f32 %v457, 0.0
    %v484 = vmax.f32 %v462, 0.0
    %v485 = vmax.f32 %v467, 0.0
    %v486 = vmax.f32 %v472, 0.0
    %v487 = vmax.f32 %v477, 0.0
    %v488 = vld [vmem:[%s4] sm:$0xff]
    %v489 = vld [vmem:[%s4 + $0x8] sm:$0xff]
    %v490 = vld [vmem:[%s4 + $0x10] sm:$0xff]
    %v491 = vld [vmem:[%s4 + $0x18] sm:$0xff]
    %493 = vset.pattern.permute.xlu0 0
    %494 = vperm.xlu0 %493, %v43
    %v495 = vpop.permute.xlu0 %494
    %498 = vset.pattern.permute.xlu0 0
    %499 = vperm.xlu0 %498, %v44
    %v500 = vpop.permute.xlu0 %499
    %503 = vset.pattern.permute.xlu0 0
    %504 = vperm.xlu0 %503, %v45
    %v505 = vpop.permute.xlu0 %504
    %508 = vset.pattern.permute.xlu0 0
    %509 = vperm.xlu0 %508, %v46
    %v510 = vpop.permute.xlu0 %509
    %vm512 = vcmask 523264
    %v514 = vsel %vm512, %v488, 0
    %v517 = vsel %vm512, %v489, 0
    %v520 = vsel %vm512, %v490, 0
    %v523 = vsel %vm512, %v491, 0
    %525 = vmatprep.subr.mxu0 0.0
    %526 = vmatpush1.msra.mxu0 0.0
    %527 = vmatprep.subr.mxu0 0.0
    %528 = vmatpush1.msra.mxu0 0.0
    %529 = vmatprep.subr.mxu0 0.0
    %530 = vmatpush1.msra.mxu0 0.0
    %531 = vmatprep.subr.mxu0 0.0
    %532 = vmatpush1.msra.mxu0 0.0
    %533 = vmatprep.subr.mxu0 0.0
    %534 = vmatpush1.msra.mxu0 0.0
    %535 = vmatprep.subr.mxu0 0.0
    %536 = vmatpush1.msra.mxu0 0.0
    %537 = vmatprep.subr.mxu0 0.0
    %538 = vmatpush1.msra.mxu0 0.0
    %539 = vmatprep.subr.mxu0 0.0
    %540 = vmatpush1.msra.mxu0 0.0
    %541 = vmatprep.subr.mxu0 0.0
    %542 = vmatpush1.msra.mxu0 %v487
    %543 = vmatprep.subr.mxu0 0.0
    %544 = vmatpush1.msra.mxu0 %v486
    %545 = vmatprep.subr.mxu0 0.0
    %546 = vmatpush1.msra.mxu0 %v485
    %547 = vmatprep.subr.mxu0 0.0
    %548 = vmatpush1.msra.mxu0 %v484
    %549 = vmatprep.subr.mxu0 0.0
    %550 = vmatpush1.msra.mxu0 %v483
    %551 = vmatprep.subr.mxu0 0.0
    %552 = vmatpush1.msra.mxu0 %v482
    %553 = vmatprep.subr.mxu0 0.0
    %554 = vmatpush1.msra.mxu0 %v481
    %555 = vmatprep.subr.mxu0 0.0
    %556 = vmatpush1.msra.mxu0 %v480
    %557 = vmatprep.subr.mxu0 0.0
    %558 = vmatpush2.msra.mxu0 0.0
    %559 = vmatprep.subr.mxu0 0.0
    %560 = vmatpush2.msra.mxu0 0.0
    %561 = vmatprep.subr.mxu0 0.0
    %562 = vmatpush2.msra.mxu0 0.0
    %563 = vmatprep.subr.mxu0 0.0
    %564 = vmatpush2.msra.mxu0 0.0
    %565 = vmatprep.subr.mxu0 0.0
    %566 = vmatpush2.msra.mxu0 0.0
    %567 = vmatprep.subr.mxu0 0.0
    %568 = vmatpush2.msra.mxu0 0.0
    %569 = vmatprep.subr.mxu0 0.0
    %570 = vmatpush2.msra.mxu0 0.0
    %571 = vmatprep.subr.mxu0 0.0
    %572 = vmatpush2.msra.mxu0 0.0
    %573 = vmatprep.subr.mxu0 0.0
    %574 = vmatpush2.msra.mxu0 0.0
    %575 = vmatprep.subr.mxu0 0.0
    %576 = vmatpush2.msra.mxu0 0.0
    %577 = vmatprep.subr.mxu0 0.0
    %578 = vmatpush2.msra.mxu0 0.0
    %579 = vmatprep.subr.mxu0 0.0
    %580 = vmatpush2.msra.mxu0 0.0
    %581 = vmatprep.subr.mxu0 0.0
    %582 = vmatpush2.msra.mxu0 0.0
    %583 = vmatprep.subr.mxu0 0.0
    %584 = vmatpush2.msra.mxu0 0.0
    %585 = vmatprep.subr.mxu0 0.0
    %586 = vmatpush2.msra.mxu0 0.0
    %587 = vmatprep.subr.mxu0 0.0
    %588 = vmatpush2.msra.mxu0 0.0
    %589 = vmatprep.mubr.f32.mxu0 0.0
    %590 = vmatmul.mubr.f32.gmra.mxu0 %v514
    %v591 = vpop.f32.mrf.mxu0
    %v592 = vadd.f32 %v495, %v591
    %v593 = vpop.f32.mrf.mxu0
    %594 = vmatprep.mubr.f32.mxu0 0.0
    %595 = vmatmul.mubr.f32.gmra.mxu0 %v517
    %v596 = vpop.f32.mrf.mxu0
    %v597 = vadd.f32 %v500, %v596
    %v598 = vpop.f32.mrf.mxu0
    %599 = vmatprep.mubr.f32.mxu0 0.0
    %600 = vmatmul.mubr.f32.gmra.mxu0 %v520
    %v601 = vpop.f32.mrf.mxu0
    %v602 = vadd.f32 %v505, %v601
    %v603 = vpop.f32.mrf.mxu0
    %604 = vmatprep.mubr.f32.mxu0 0.0
    %605 = vmatmul.mubr.f32.gmra.mxu0 %v523
    %v606 = vpop.f32.mrf.mxu0
    %v607 = vadd.f32 %v510, %v606
    %v608 = vpop.f32.mrf.mxu0
    %609 = vdwg.mxu0
    %v610 = vmax.f32 %v592, 0.0
    %v611 = vmax.f32 %v597, 0.0
    %v612 = vmax.f32 %v602, 0.0
    %v613 = vmax.f32 %v607, 0.0
    %v614 = vld [vmem:[%s5] sm:$0xff]
    %v615 = vld [vmem:[%s5 + $0x8] sm:$0xff]
    %v616 = vld [vmem:[%s5 + $0x10] sm:$0xff]
    %v617 = vld [vmem:[%s5 + $0x18] sm:$0xff]
    %619 = vset.pattern.permute.xlu0 0
    %620 = vperm.xlu0 %619, %v614
    %v621 = vpop.permute.xlu0 %620
    %624 = vset.pattern.permute.xlu0 0
    %625 = vperm.xlu0 %624, %v615
    %v626 = vpop.permute.xlu0 %625
    %629 = vset.pattern.permute.xlu0 0
    %630 = vperm.xlu0 %629, %v616
    %v631 = vpop.permute.xlu0 %630
    %634 = vset.pattern.permute.xlu0 0
    %635 = vperm.xlu0 %634, %v617
    %v636 = vpop.permute.xlu0 %635
    %v638 = vmul.f32 %v610, %v621
    %v639 = vmul.f32 %v611, %v626
    %v640 = vmul.f32 %v612, %v631
    %v641 = vmul.f32 %v613, %v636
    %vm642 = vcmask 64512
    %v643 = vsel %vm642, %v638, 0.0
    %v644 = vsel %vm642, %v639, 0.0
    %v645 = vadd.f32 %v643, %v644
    %v646 = vsel %vm642, %v640, 0.0
    %v647 = vadd.f32 %v645, %v646
    %v648 = vsel %vm642, %v641, 0.0
    %v649 = vadd.f32 %v647, %v648
    %v650 = vrot.slane %v649, 4
    %v651 = vadd.f32 %v649, %v650
    %v652 = vrot.slane %v651, 2
    %v653 = vadd.f32 %v651, %v652
    %v654 = vrot.slane %v653, 1
    %v655 = vadd.f32 %v653, %v654
    %657 = vset.pattern.permute.xlu0 0
    %658 = vperm.xlu0 %657, %v47
    %v659 = vpop.permute.xlu0 %658
    %v661 = vadd.f32 %v655, %v659
    %vm662 = vcmask 57344
    %663 = vst.msk [vmem:[#allocation2] sm:$0x1] %vm662, %v661
    // Predicated region
    $region30: #{tpu_custom_call.1} parent=1 // pred_check
      _
    $region31: #{tpu_custom_call.1} parent=1 // pred_check_branch
      %665 = sbr.rel (0) target = $region33
    $region32: #{tpu_custom_call.1} parent=1 // pred_region
      %s667 = ssub.s32 16, 16
      %668 = vsyncadd [#allocation3], %s667
      %s670 = sshll.u32 [#allocation2], 4
      %s671 = int_to_ptr.vmem [resolvable:$true] %s670
      %673 = dma.vmem_to_hbm [thread:$0]  %s671, 16, %s7, [#allocation3]
    $region33: #{tpu_custom_call.1} parent=1 // pred_fallthru
      _
    // Predicated region
    $region34: #{tpu_custom_call.1} parent=1 // pred_check
      _
    $region35: #{tpu_custom_call.1} parent=1 // pred_check_branch
      %675 = sbr.rel (0) target = $region37
    $region36: #{tpu_custom_call.1} parent=1 // pred_region
      %676 = dma.done [#allocation3], 16
    $region37: #{tpu_custom_call.1} parent=1 // pred_fallthru
      _
    %677 = vsyncpa [#allocation3], 1

</llo_original>
